<compile_context>
chip_gen: v7x
topology: tpu7x:2x2x1
jax: 0.10.0
libtpu: 0.0.40
codegen_flags: <defaults>
</compile_context>

<pallas_src>
import jax
import jax.numpy as jnp
from jax.experimental import pallas as pl
from jax.experimental.pallas import tpu as pltpu

_COMPUTE_DTYPE = jnp.bfloat16   # MXU inputs; accumulation is always f32


# ----------------------------------------------------------------------------
# generation-aware sizing
# ----------------------------------------------------------------------------
def _tpu_vmem_capacity_bytes():
    try:
        info = pltpu.get_tpu_info()
        cap = getattr(info, "vmem_capacity_bytes", None)
        if cap:
            return int(cap)
    except Exception:
        pass
    return 64 * 1024 * 1024   # conservative default (v7x per-TC size)


_VMEM_CAP = _tpu_vmem_capacity_bytes()
# v5e/v6e (128 MiB): ~96 MiB scoped limit, 1024-row blocks.
# v7x (64 MiB): 48 MiB scoped limit, 512-row blocks.
_VMEM_LIMIT = min((_VMEM_CAP * 3) // 4, 96 * 1024 * 1024)
_TARGET_ROWS = 1024 if _VMEM_CAP >= (100 << 20) else 512


# ----------------------------------------------------------------------------
# helpers
# ----------------------------------------------------------------------------
def _softmax_lastdim(scores, approx=True):
    """f32 softmax over the last dim; divide goes to the EUP via approx reciprocal
    (exact divide available for the training-loss path)."""
    m = jnp.max(scores, axis=-1, keepdims=True)
    p = jnp.exp(scores - m)
    s = jnp.sum(p, axis=-1, keepdims=True)
    if approx:
        return p * pl.reciprocal(s, approx=True)
    return p / s


def _pick_block(batch, rows_per_item):
    """Largest divisor of `batch` covering <= _TARGET_ROWS projection rows per
    grid step.  No forced split: v5e/v6e have one TensorCore, so extra grid
    steps only add per-step overhead.  (On v7x, prefer even step counts.)"""
    want = max(1, _TARGET_ROWS // max(rows_per_item, 1))
    best = 1
    for d in range(1, batch + 1):
        if batch % d == 0 and d <= want:
            best = d
    return best


def _pick_score_block(batch):
    """Score-kernel batch block: single step for small batches; multiples of 8
    up to 128 otherwise (2-D output blocks need sublane dim % 8 == 0 or the
    full batch)."""
    if batch <= 128:
        return batch
    best = batch
    for d in range(8, 129, 8):
        if batch % d == 0:
            best = d
    return best


# ----------------------------------------------------------------------------
# Kernel 1: fused context path — masked self-attention encoder + poly-code
#           dot_attention, one batch block per grid step.
# ----------------------------------------------------------------------------
def _context_kernel(x_ref, bias_ref, wqkv_ref, wo_ref, poly_ref, out_ref):
    bblk, seq_len, hidden = x_ref.shape
    m = poly_ref.shape[0]
    x_bf = x_ref[...]                                   # (Bb, L, H) bf16
    bias = bias_ref[...]                                # (Bb, 1, L) f32 additive mask
    wqkv = wqkv_ref[...]                                # (H, 3H) bf16, scale folded in Q
    wo = wo_ref[...]                                    # (H, H)  bf16
    poly = poly_ref[...]                                # (M, H)  bf16, VMEM-resident

    # Fused QKV projection: all Bb*L rows in one MXU matmul (bf16 in, f32 acc).
    x2d = x_bf.reshape(bblk * seq_len, hidden)
    qkv = jnp.dot(x2d, wqkv, preferred_element_type=jnp.float32)
    qkv = qkv.reshape(bblk, seq_len, 3 * hidden)
    q = qkv[..., :hidden].astype(_COMPUTE_DTYPE)
    k = qkv[..., hidden:2 * hidden].astype(_COMPUTE_DTYPE)
    v = qkv[..., 2 * hidden:].astype(_COMPUTE_DTYPE)

    # Masked self-attention (contract last dims; no explicit transposes).
    scores = jnp.einsum("bqd,bkd->bqk", q, k,
                        preferred_element_type=jnp.float32) + bias
    attn = _softmax_lastdim(scores)
    ctx = jnp.einsum("bqk,bkd->bqd", attn.astype(_COMPUTE_DTYPE), v,
                     preferred_element_type=jnp.float32)            # (Bb, L, H)

    # Output projection + residual (residual needs f32 of the full block).
    ctx2d = ctx.reshape(bblk * seq_len, hidden).astype(_COMPUTE_DTYPE)
    h = jnp.dot(ctx2d, wo, preferred_element_type=jnp.float32)
    h = h.reshape(bblk, seq_len, hidden) + x_bf.astype(jnp.float32)  # (Bb, L, H) f32

    # Poly-code dot_attention (reference semantics: no mask, no scale).
    # Logits via ONE full-height matmul (Bb*L, H) x (H, M), then an XLU
    # swapaxes (Bb, L, M) -> (Bb, M, L) before the softmax.
    h_bf = h.astype(_COMPUTE_DTYPE)
    plog = jnp.einsum("nh,mh->nm", h_bf.reshape(bblk * seq_len, hidden), poly,
                      preferred_element_type=jnp.float32)            # (Bb*L, M)
    plog = jnp.swapaxes(plog.reshape(bblk, seq_len, m), 1, 2)        # (Bb, M, L)
    pattn = _softmax_lastdim(plog)
    out = jnp.einsum("bml,bld->bmd", pattn.astype(_COMPUTE_DTYPE), h_bf,
                     preferred_element_type=jnp.float32)             # (Bb, M, H)
    out_ref[...] = out.astype(out_ref.dtype)                         # bf16 store


def encode_context_fused(x, bias, w_qkv, w_o, poly):
    batch, seq_len, hidden = x.shape
    m = poly.shape[0]
    bblk = _pick_block(batch, seq_len)
    return pl.pallas_call(
        _context_kernel,
        out_shape=jax.ShapeDtypeStruct((batch, m, hidden), _COMPUTE_DTYPE),
        grid=(batch // bblk,),
        in_specs=[
            pl.BlockSpec((bblk, seq_len, hidden), lambda i: (i, 0, 0)),
            pl.BlockSpec((bblk, 1, seq_len), lambda i: (i, 0, 0)),
            pl.BlockSpec((hidden, 3 * hidden), lambda i: (0, 0)),   # resident
            pl.BlockSpec((hidden, hidden), lambda i: (0, 0)),       # resident
            pl.BlockSpec((m, hidden), lambda i: (0, 0)),            # resident
        ],
        out_specs=pl.BlockSpec((bblk, m, hidden), lambda i: (i, 0, 0)),
        compiler_params=pltpu.CompilerParams(
            dimension_semantics=("parallel",),
            vmem_limit_bytes=_VMEM_LIMIT),
    )(x, bias, w_qkv, w_o, poly)


# ----------------------------------------------------------------------------
# Kernel 2: response encoder — CLS-only attention.  Only the CLS query is
#           projected / attended (scores are (N, 1, L)), and only the CLS row
#           is output-projected and written back.
# ----------------------------------------------------------------------------
def _response_kernel(x_ref, bias_ref, wq_ref, wkv_ref, wo_ref, cls_ref):
    bblk, num_r, seq_len, hidden = x_ref.shape
    n = bblk * num_r
    x_bf = x_ref[...].reshape(n, seq_len, hidden)        # (N, L, H) bf16
    bias = bias_ref[...].reshape(n, 1, seq_len)           # (N, 1, L) f32
    wq = wq_ref[...]                                       # (H, H)  bf16 (scale folded)
    wkv = wkv_ref[...]                                     # (H, 2H) bf16
    wo = wo_ref[...]                                       # (H, H)  bf16
    x_cls = x_bf[:, 0, :]                                  # (N, H) bf16

    # K/V projection for all rows (one MXU matmul); Q only for the CLS row.
    kv = jnp.dot(x_bf.reshape(n * seq_len, hidden), wkv,
                 preferred_element_type=jnp.float32).reshape(n, seq_len, 2 * hidden)
    k = kv[..., :hidden].astype(_COMPUTE_DTYPE)
    v = kv[..., hidden:].astype(_COMPUTE_DTYPE)
    q_cls = jnp.dot(x_cls, wq, preferred_element_type=jnp.float32)
    q_cls = q_cls.astype(_COMPUTE_DTYPE)[:, None, :]       # (N, 1, H)

    # CLS-only masked attention: scores are (N, 1, L), not (N, L, L).
    scores = jnp.einsum("bqd,bkd->bqk", q_cls, k,
                        preferred_element_type=jnp.float32) + bias
    attn = _softmax_lastdim(scores)                        # (N, 1, L)
    ctx_cls = jnp.einsum("bqk,bkd->bqd", attn.astype(_COMPUTE_DTYPE), v,
                         preferred_element_type=jnp.float32)[:, 0, :]  # (N, H)

    # Output projection + residual for the CLS row only (f32 only where needed).
    cls = jnp.dot(ctx_cls.astype(_COMPUTE_DTYPE), wo,
                  preferred_element_type=jnp.float32) + x_cls.astype(jnp.float32)
    cls_ref[...] = cls.reshape(bblk, num_r, hidden).astype(cls_ref.dtype)


def encode_response_fused(x, bias, w_q, w_kv, w_o):
    batch, num_r, seq_len, hidden = x.shape
    bblk = _pick_block(batch, num_r * seq_len)
    return pl.pallas_call(
        _response_kernel,
        out_shape=jax.ShapeDtypeStruct((batch, num_r, hidden), _COMPUTE_DTYPE),
        grid=(batch // bblk,),
        in_specs=[
            pl.BlockSpec((bblk, num_r, seq_len, hidden), lambda i: (i, 0, 0, 0)),
            pl.BlockSpec((bblk, num_r, 1, seq_len), lambda i: (i, 0, 0, 0)),
            pl.BlockSpec((hidden, hidden), lambda i: (0, 0)),       # resident
            pl.BlockSpec((hidden, 2 * hidden), lambda i: (0, 0)),   # resident
            pl.BlockSpec((hidden, hidden), lambda i: (0, 0)),       # resident
        ],
        out_specs=pl.BlockSpec((bblk, num_r, hidden), lambda i: (i, 0, 0)),
        compiler_params=pltpu.CompilerParams(
            dimension_semantics=("parallel",),
            vmem_limit_bytes=_VMEM_LIMIT),
    )(x, bias, w_q, w_kv, w_o)


# ----------------------------------------------------------------------------
# Kernel 3: inference scoring — lane-dense (B, R) output.
#   score[b, r] = sum_m softmax(logits)[b, r, m] * logits[b, r, m]
#   (identity of (attn @ ctx) . resp; one matmul + M-wide epilogue).
# ----------------------------------------------------------------------------
def _score_kernel(r_ref, c_ref, s_ref):
    r_bf = r_ref[...]                                      # (Bb, R, H) bf16
    c_bf = c_ref[...]                                      # (Bb, M, H) bf16
    logits = jnp.einsum("brh,bmh->brm", r_bf, c_bf,
                        preferred_element_type=jnp.float32)
    attn = _softmax_lastdim(logits)
    s_ref[...] = jnp.sum(attn * logits, axis=-1)           # (Bb, R) lane-dense


def poly_score(responses, contexts):
    batch, num_r, hidden = responses.shape
    m = contexts.shape[1]
    bblk = _pick_score_block(batch)
    return pl.pallas_call(
        _score_kernel,
        out_shape=jax.ShapeDtypeStruct((batch, num_r), jnp.float32),
        grid=(batch // bblk,),
        in_specs=[
            pl.BlockSpec((bblk, num_r, hidden), lambda i: (i, 0, 0)),
            pl.BlockSpec((bblk, m, hidden), lambda i: (i, 0, 0)),
        ],
        out_specs=pl.BlockSpec((bblk, num_r), lambda i: (i, 0)),
        compiler_params=pltpu.CompilerParams(
            dimension_semantics=("parallel",),
            vmem_limit_bytes=_VMEM_LIMIT),
    )(responses, contexts)


# ----------------------------------------------------------------------------
# Kernel 4: training scores — full (B, B) matrix via ONE flattened
#           (Bb*M, H) x (H, B) matmul + XLU swapaxes; responses (B, H) stay
#           VMEM-resident.  Same softmax.logits identity.
# ----------------------------------------------------------------------------
def _loss_score_kernel(resp_ref, c_ref, s_ref):
    bblk, m, hidden = c_ref.shape
    r_bf = resp_ref[...]                                    # (B, H) bf16, resident
    c_bf = c_ref[...]                                       # (Bb, M, H) bf16
    logits = jnp.einsum("nh,rh->nr", c_bf.reshape(bblk * m, hidden), r_bf,
                        preferred_element_type=jnp.float32)  # (Bb*M, B)
    logits = jnp.swapaxes(logits.reshape(bblk, m, r_bf.shape[0]), 1, 2)  # (Bb, B, M)
    attn = _softmax_lastdim(logits, approx=False)           # exact for the loss path
    s_ref[...] = jnp.sum(attn * logits, axis=-1)            # (Bb, B) lane-dense


def poly_loss_scores(responses, contexts):
    batch, hidden = responses.shape
    m = contexts.shape[1]
    bblk = _pick_score_block(batch)
    return pl.pallas_call(
        _loss_score_kernel,
        out_shape=jax.ShapeDtypeStruct((batch, batch), jnp.float32),
        grid=(batch // bblk,),
        in_specs=[
            pl.BlockSpec((batch, hidden), lambda i: (0, 0)),        # resident
            pl.BlockSpec((bblk, m, hidden), lambda i: (i, 0, 0)),
        ],
        out_specs=pl.BlockSpec((bblk, batch), lambda i: (i, 0)),
        compiler_params=pltpu.CompilerParams(
            dimension_semantics=("parallel",),
            vmem_limit_bytes=_VMEM_LIMIT),
    )(responses, contexts)


# ----------------------------------------------------------------------------
# Poly-encoder glue (embedding gather / reshape / loss epilogue stay in JAX).
# TODO(synk): embedding gather could be fused into the encoder kernels via
#             scalar-prefetched input_ids + row DMA gather (lower priority).
# ----------------------------------------------------------------------------
def embed_tokens(input_ids, attention_masks, params):
    seq_len = input_ids.shape[-1]
    tok = jnp.take(params["tok_emb"], input_ids, axis=0)            # (..., L, H)
    pos = params["pos_emb"][:seq_len]
    x = (tok + pos).astype(_COMPUTE_DTYPE)                          # bf16 (half DMA)
    bias = ((1.0 - attention_masks.astype(jnp.float32)) * -1e9)[..., None, :]
    return x, bias


def encode_context(context_input_ids, context_input_masks, params):
    x, bias = embed_tokens(context_input_ids, context_input_masks, params)
    return encode_context_fused(x, bias, params["w_qkv"], params["w_o"],
                                params["poly_emb"])                 # (B, M, H) bf16


def encode_response(responses_input_ids, responses_input_masks, params):
    x, bias = embed_tokens(responses_input_ids, responses_input_masks, params)
    return encode_response_fused(x, bias, params["w_q"], params["w_kv"],
                                 params["w_o"])                     # (B, R, H) bf16


def get_score(contexts, responses):
    return poly_score(responses, contexts)                          # (B, R)


def get_loss(contexts, responses):
    batch = contexts.shape[0]
    resp = responses[:, 0, :]                                       # (B, H), single candidate
    dot_product = poly_loss_scores(resp, contexts)                  # (B, B)
    mask = jnp.eye(batch, dtype=jnp.float32)
    logp = jax.nn.log_softmax(dot_product, axis=-1) * mask          # loss epilogue (glue)
    return (-logp.sum(axis=1)).mean()


def poly_encoder_forward(context_input_ids, context_input_masks,
                         responses_input_ids, responses_input_masks,
                         params, labels=None):
    is_training = labels is not None
    if is_training:
        responses_input_ids = responses_input_ids[:, 0:1, :]
        responses_input_masks = responses_input_masks[:, 0:1, :]
    contexts = encode_context(context_input_ids, context_input_masks, params)
    responses = encode_response(responses_input_ids, responses_input_masks, params)
    if is_training:
        return get_loss(contexts, responses)
    return get_score(contexts, responses)


# ----------------------------------------------------------------------------
# Deterministic parameter construction + example run.
# ----------------------------------------------------------------------------
def make_params(key, vocab, hidden, max_len, num_poly_codes):
    ks = jax.random.split(key, 7)
    scale = 0.02
    wq = scale * jax.random.normal(ks[2], (hidden, hidden), jnp.float32)
    wk = scale * jax.random.normal(ks[3], (hidden, hidden), jnp.float32)
    wv = scale * jax.random.normal(ks[4], (hidden, hidden), jnp.float32)
    wo = scale * jax.random.normal(ks[5], (hidden, hidden), jnp.float32)
    # Fold the 1/sqrt(H) attention scale into the Q columns.
    wq_scaled = wq * (hidden ** -0.5)
    w_qkv = jnp.concatenate([wq_scaled, wk, wv], axis=1)            # context kernel
    w_kv = jnp.concatenate([wk, wv], axis=1)                        # response kernel
    # matches torch.nn.init.normal_(w, hidden**-0.5): mean = hidden**-0.5, std = 1
    poly = hidden ** (-0.5) + jax.random.normal(ks[6], (num_poly_codes, hidden),
                                                jnp.float32)
    return {
        "tok_emb": scale * jax.random.normal(ks[0], (vocab, hidden), jnp.float32),
        "pos_emb": scale * jax.random.normal(ks[1], (max_len, hidden), jnp.float32),
        "w_qkv": w_qkv.astype(_COMPUTE_DTYPE),
        "w_q": wq_scaled.astype(_COMPUTE_DTYPE),
        "w_kv": w_kv.astype(_COMPUTE_DTYPE),
        "w_o": wo.astype(_COMPUTE_DTYPE),
        "poly_emb": poly.astype(_COMPUTE_DTYPE),
    }


if __name__ == "__main__":
    B, L, R = 2, 8, 4          # batch, seq length, num candidate responses
    V, H, M = 64, 128, 16      # vocab, hidden (lane-aligned), num_poly_codes

    key = jax.random.PRNGKey(0)
    k_par, k_cid, k_rid = jax.random.split(key, 3)
    params = make_params(k_par, V, H, L, M)

    context_input_ids = jax.random.randint(k_cid, (B, L), 0, V, dtype=jnp.int32)
    context_input_masks = jnp.ones((B, L), jnp.float32).at[:, L - 2:].set(0.0)
    responses_input_ids = jax.random.randint(k_rid, (B, R, L), 0, V, dtype=jnp.int32)
    responses_input_masks = jnp.ones((B, R, L), jnp.float32)

    # Inference path (labels=None): per-candidate scores (B, R)
    scores = poly_encoder_forward(context_input_ids, context_input_masks,
                                  responses_input_ids, responses_input_masks,
                                  params, labels=None)
    jax.block_until_ready(scores)
    assert scores.shape == (B, R)
    assert bool(jnp.all(jnp.isfinite(scores)))

    # Training path (labels provided): scalar in-batch-negatives loss
    labels = jnp.arange(B, dtype=jnp.int32)
    loss = poly_encoder_forward(context_input_ids, context_input_masks,
                                responses_input_ids, responses_input_masks,
                                params, labels=labels)
    jax.block_until_ready(loss)
    assert loss.shape == ()
    assert bool(jnp.isfinite(loss))

    print("KERNEL_OK")
</pallas_src>

<mosaic_0001>
module attributes {stable_mosaic.version = 11 : i64} {
  func.func @_context_kernel(%arg0: i32, %arg1: memref<2x8x128xbf16, #tpu.memory_space<vmem>>, %arg2: memref<2x1x8xf32, #tpu.memory_space<vmem>>, %arg3: memref<128x384xbf16, #tpu.memory_space<vmem>>, %arg4: memref<128x128xbf16, #tpu.memory_space<vmem>>, %arg5: memref<16x128xbf16, #tpu.memory_space<vmem>>, %arg6: memref<2x16x128xbf16, #tpu.memory_space<vmem>>) attributes {dimension_semantics = [#tpu.dimension_semantics<parallel>], iteration_bounds = array<i64: 1>, scalar_prefetch = 0 : i64, scratch_operands = 0 : i64, tpu.core_type = #tpu.core_type<tc>, window_params = [{transform_indices = @transform_0, window_bounds = array<i64: 2, 8, 128>}, {transform_indices = @transform_1, window_bounds = array<i64: 2, 1, 8>}, {pipeline_mode = #tpu.pipeline_mode<synchronous>, transform_indices = @transform_2, window_bounds = array<i64: 128, 384>}, {pipeline_mode = #tpu.pipeline_mode<synchronous>, transform_indices = @transform_3, window_bounds = array<i64: 128, 128>}, {pipeline_mode = #tpu.pipeline_mode<synchronous>, transform_indices = @transform_4, window_bounds = array<i64: 16, 128>}, {transform_indices = @transform_5, window_bounds = array<i64: 2, 16, 128>}]} {
    %c0 = arith.constant 0 : index
    %c0_0 = arith.constant 0 : index
    %c0_1 = arith.constant 0 : index
    %0 = vector.load %arg1[%c0, %c0_0, %c0_1] : memref<2x8x128xbf16, #tpu.memory_space<vmem>>, vector<2x8x128xbf16>
    %c0_2 = arith.constant 0 : index
    %c0_3 = arith.constant 0 : index
    %c0_4 = arith.constant 0 : index
    %1 = vector.load %arg2[%c0_2, %c0_3, %c0_4] : memref<2x1x8xf32, #tpu.memory_space<vmem>>, vector<2x1x8xf32>
    %c0_5 = arith.constant 0 : index
    %c0_6 = arith.constant 0 : index
    %2 = vector.load %arg3[%c0_5, %c0_6] : memref<128x384xbf16, #tpu.memory_space<vmem>>, vector<128x384xbf16>
    %c0_7 = arith.constant 0 : index
    %c0_8 = arith.constant 0 : index
    %3 = vector.load %arg4[%c0_7, %c0_8] : memref<128x128xbf16, #tpu.memory_space<vmem>>, vector<128x128xbf16>
    %c0_9 = arith.constant 0 : index
    %c0_10 = arith.constant 0 : index
    %4 = vector.load %arg5[%c0_9, %c0_10] : memref<16x128xbf16, #tpu.memory_space<vmem>>, vector<16x128xbf16>
    %5 = vector.shape_cast %0 : vector<2x8x128xbf16> to vector<16x128xbf16>
    %cst = arith.constant dense<0.000000e+00> : vector<16x384xf32>
    %6 = tpu.matmul %5, %2, %cst {dimension_numbers = #tpu.dot_dimension_numbers<[1], [0], [0], [1], [0, 0, 1, 1], [], []>} : vector<16x128xbf16>, vector<128x384xbf16>, vector<16x384xf32> -> vector<16x384xf32>
    %7 = vector.shape_cast %6 : vector<16x384xf32> to vector<2x8x384xf32>
    %8 = vector.extract_strided_slice %7 {offsets = [0, 0, 0], sizes = [2, 8, 128], strides = [1, 1, 1]} : vector<2x8x384xf32> to vector<2x8x128xf32>
    %9 = arith.truncf %8 : vector<2x8x128xf32> to vector<2x8x128xbf16>
    %10 = vector.extract_strided_slice %7 {offsets = [0, 0, 128], sizes = [2, 8, 128], strides = [1, 1, 1]} : vector<2x8x384xf32> to vector<2x8x128xf32>
    %11 = arith.truncf %10 : vector<2x8x128xf32> to vector<2x8x128xbf16>
    %12 = vector.extract_strided_slice %7 {offsets = [0, 0, 256], sizes = [2, 8, 128], strides = [1, 1, 1]} : vector<2x8x384xf32> to vector<2x8x128xf32>
    %13 = arith.truncf %12 : vector<2x8x128xf32> to vector<2x8x128xbf16>
    "tpu.trace_start"() <{level = 10 : i32, message = "bqd,bkd->bqk"}> : () -> ()
    %cst_11 = arith.constant dense<0.000000e+00> : vector<2x8x8xf32>
    %14 = tpu.matmul %9, %11, %cst_11 {dimension_numbers = #tpu.dot_dimension_numbers<[2], [2], [1], [1], [0, 0, 0, 1, 1, 1], [0], [0]>} : vector<2x8x128xbf16>, vector<2x8x128xbf16>, vector<2x8x8xf32> -> vector<2x8x8xf32>
    "tpu.trace_stop"() : () -> ()
    %15 = vector.broadcast %1 : vector<2x1x8xf32> to vector<2x8x8xf32>
    %16 = arith.addf %14, %15 : vector<2x8x8xf32>
    %cst_12 = arith.constant dense<0xFF800000> : vector<2x8xf32>
    %17 = vector.multi_reduction <maximumf>, %16, %cst_12 [2] : vector<2x8x8xf32> to vector<2x8xf32>
    %18 = vector.shape_cast %17 : vector<2x8xf32> to vector<2x8x1xf32>
    %19 = vector.broadcast %18 : vector<2x8x1xf32> to vector<2x8x8xf32>
    %20 = arith.subf %16, %19 : vector<2x8x8xf32>
    %21 = math.exp %20 : vector<2x8x8xf32>
    %cst_13 = arith.constant dense<0.000000e+00> : vector<2x8xf32>
    %22 = vector.multi_reduction <add>, %21, %cst_13 [2] : vector<2x8x8xf32> to vector<2x8xf32>
    %23 = vector.shape_cast %22 : vector<2x8xf32> to vector<2x8x1xf32>
    %24 = tpu.reciprocal %23 {approx = true} : vector<2x8x1xf32> -> vector<2x8x1xf32>
    %25 = vector.broadcast %24 : vector<2x8x1xf32> to vector<2x8x8xf32>
    %26 = arith.mulf %21, %25 : vector<2x8x8xf32>
    %27 = arith.truncf %26 : vector<2x8x8xf32> to vector<2x8x8xbf16>
    "tpu.trace_start"() <{level = 10 : i32, message = "bqk,bkd->bqd"}> : () -> ()
    %cst_14 = arith.constant dense<0.000000e+00> : vector<2x8x128xf32>
    %28 = tpu.matmul %27, %13, %cst_14 {dimension_numbers = #tpu.dot_dimension_numbers<[2], [1], [1], [2], [0, 0, 0, 1, 1, 2], [0], [0]>} : vector<2x8x8xbf16>, vector<2x8x128xbf16>, vector<2x8x128xf32> -> vector<2x8x128xf32>
    "tpu.trace_stop"() : () -> ()
    %29 = vector.shape_cast %28 : vector<2x8x128xf32> to vector<16x128xf32>
    %30 = arith.truncf %29 : vector<16x128xf32> to vector<16x128xbf16>
    %cst_15 = arith.constant dense<0.000000e+00> : vector<16x128xf32>
    %31 = tpu.matmul %30, %3, %cst_15 {dimension_numbers = #tpu.dot_dimension_numbers<[1], [0], [0], [1], [0, 0, 1, 1], [], []>} : vector<16x128xbf16>, vector<128x128xbf16>, vector<16x128xf32> -> vector<16x128xf32>
    %32 = vector.shape_cast %31 : vector<16x128xf32> to vector<2x8x128xf32>
    %33 = arith.extf %0 : vector<2x8x128xbf16> to vector<2x8x128xf32>
    %34 = arith.addf %32, %33 : vector<2x8x128xf32>
    %35 = arith.truncf %34 : vector<2x8x128xf32> to vector<2x8x128xbf16>
    %36 = vector.shape_cast %35 : vector<2x8x128xbf16> to vector<16x128xbf16>
    "tpu.trace_start"() <{level = 10 : i32, message = "nh,mh->nm"}> : () -> ()
    %cst_16 = arith.constant dense<0.000000e+00> : vector<16x16xf32>
    %37 = tpu.matmul %36, %4, %cst_16 {dimension_numbers = #tpu.dot_dimension_numbers<[1], [1], [0], [0], [0, 0, 1, 0], [], []>} : vector<16x128xbf16>, vector<16x128xbf16>, vector<16x16xf32> -> vector<16x16xf32>
    "tpu.trace_stop"() : () -> ()
    %38 = vector.shape_cast %37 : vector<16x16xf32> to vector<2x8x16xf32>
    %39 = tpu.transpose %38, [0, 2, 1] : vector<2x8x16xf32> -> vector<2x16x8xf32>
    %cst_17 = arith.constant dense<0xFF800000> : vector<2x16xf32>
    %40 = vector.multi_reduction <maximumf>, %39, %cst_17 [2] : vector<2x16x8xf32> to vector<2x16xf32>
    %41 = vector.shape_cast %40 : vector<2x16xf32> to vector<2x16x1xf32>
    %42 = vector.broadcast %41 : vector<2x16x1xf32> to vector<2x16x8xf32>
    %43 = arith.subf %39, %42 : vector<2x16x8xf32>
    %44 = math.exp %43 : vector<2x16x8xf32>
    %cst_18 = arith.constant dense<0.000000e+00> : vector<2x16xf32>
    %45 = vector.multi_reduction <add>, %44, %cst_18 [2] : vector<2x16x8xf32> to vector<2x16xf32>
    %46 = vector.shape_cast %45 : vector<2x16xf32> to vector<2x16x1xf32>
    %47 = tpu.reciprocal %46 {approx = true} : vector<2x16x1xf32> -> vector<2x16x1xf32>
    %48 = vector.broadcast %47 : vector<2x16x1xf32> to vector<2x16x8xf32>
    %49 = arith.mulf %44, %48 : vector<2x16x8xf32>
    %50 = arith.truncf %49 : vector<2x16x8xf32> to vector<2x16x8xbf16>
    "tpu.trace_start"() <{level = 10 : i32, message = "bml,bld->bmd"}> : () -> ()
    %cst_19 = arith.constant dense<0.000000e+00> : vector<2x16x128xf32>
    %51 = tpu.matmul %50, %35, %cst_19 {dimension_numbers = #tpu.dot_dimension_numbers<[2], [1], [1], [2], [0, 0, 0, 1, 1, 2], [0], [0]>} : vector<2x16x8xbf16>, vector<2x8x128xbf16>, vector<2x16x128xf32> -> vector<2x16x128xf32>
    "tpu.trace_stop"() : () -> ()
    %52 = arith.truncf %51 : vector<2x16x128xf32> to vector<2x16x128xbf16>
    %c0_20 = arith.constant 0 : index
    %c0_21 = arith.constant 0 : index
    %c0_22 = arith.constant 0 : index
    %53 = vector.load %arg6[%c0_20, %c0_21, %c0_22] : memref<2x16x128xbf16, #tpu.memory_space<vmem>>, vector<2x16x128xbf16>
    tpu.vector_store %arg6[%c0_20, %c0_21, %c0_22], %52 {strides = array<i32>} : memref<2x16x128xbf16, #tpu.memory_space<vmem>>, vector<2x16x128xbf16>,
    return
  }
  func.func @transform_0(%arg0: i32) -> (i32, i32, i32) {
    %c0_i32 = arith.constant 0 : i32
    %c0_i32_0 = arith.constant 0 : i32
    %c0_i32_1 = arith.constant 0 : i32
    return %arg0, %c0_i32, %c0_i32_0 : i32, i32, i32
  }
  func.func @transform_1(%arg0: i32) -> (i32, i32, i32) {
    %c0_i32 = arith.constant 0 : i32
    %c0_i32_0 = arith.constant 0 : i32
    %c0_i32_1 = arith.constant 0 : i32
    return %arg0, %c0_i32, %c0_i32_0 : i32, i32, i32
  }
  func.func @transform_2(%arg0: i32) -> (i32, i32) {
    %c0_i32 = arith.constant 0 : i32
    %c0_i32_0 = arith.constant 0 : i32
    %c0_i32_1 = arith.constant 0 : i32
    return %c0_i32, %c0_i32_0 : i32, i32
  }
  func.func @transform_3(%arg0: i32) -> (i32, i32) {
    %c0_i32 = arith.constant 0 : i32
    %c0_i32_0 = arith.constant 0 : i32
    %c0_i32_1 = arith.constant 0 : i32
    return %c0_i32, %c0_i32_0 : i32, i32
  }
  func.func @transform_4(%arg0: i32) -> (i32, i32) {
    %c0_i32 = arith.constant 0 : i32
    %c0_i32_0 = arith.constant 0 : i32
    %c0_i32_1 = arith.constant 0 : i32
    return %c0_i32, %c0_i32_0 : i32, i32
  }
  func.func @transform_5(%arg0: i32) -> (i32, i32, i32) {
    %c0_i32 = arith.constant 0 : i32
    %c0_i32_0 = arith.constant 0 : i32
    %c0_i32_1 = arith.constant 0 : i32
    return %arg0, %c0_i32, %c0_i32_0 : i32, i32, i32
  }
}

</mosaic_0001>

<llo_original>
// kernel: tpu_custom_call.1
$region0: #{tpu_custom_call.1}
  #allocation0 [shape = 'u32[]', space=smem, size = 0x4, offset = 0x4, fixed_abs, tag = 'smem constant byte address 0x4 - core index']
  #allocation1 [shape = 'u32[144,128]{1,0:T(1,128)}', space=vmem, size = 0x12000, scoped, tag = 'internal scratch']
  %s0 = inlined_call_operand.hbm [shape: bf16[2,8,128], index: 0, kind: input, shape index: {}]
  %s1 = inlined_call_operand.vmem [shape: f32[2,1,8], index: 1, kind: input, shape index: {}]
  %s2 = inlined_call_operand.hbm [shape: bf16[128,384], index: 2, kind: input, shape index: {}]
  %s3 = inlined_call_operand.hbm [shape: bf16[128,128], index: 3, kind: input, shape index: {}]
  %s4 = inlined_call_operand.vmem [shape: bf16[16,128], index: 4, kind: input, shape index: {}]
  %s5 = inlined_call_operand.hbm [shape: bf16[2,16,128], index: 5, kind: output, shape index: {}]
  %s6 = sld [smem:[#allocation0]]
  $region42: #{tpu_custom_call.1} parent=0
    _
  %s8 = ssub.s32 1, %s6
  %s9 = scalar_select 0, %s8, %s6
  $region1: #{tpu_custom_call.1} parent=0
    #allocation2 [shape = 'u8[4096]{0}', space=vmem, size = 0x1000, scoped, tag = 'input window, operand 0, single buffered']
    #allocation3 [shape = 's32[1]{0}', space=sflag, size = 0x4, scoped, tag = 'scoped memory for tpu_custom_call.1']
    #allocation4 [shape = 's32[1]{0}', space=sflag, size = 0x4, scoped, tag = 'scoped memory for tpu_custom_call.1']
    #allocation5 [shape = 'u8[98304]{0}', space=vmem, size = 0x18000, scoped, tag = 'input window, operand 2, single buffered']
    #allocation6 [shape = 's32[1]{0}', space=sflag, size = 0x4, scoped, tag = 'scoped memory for tpu_custom_call.1']
    #allocation7 [shape = 'u8[32768]{0}', space=vmem, size = 0x8000, scoped, tag = 'input window, operand 3, single buffered']
    #allocation8 [shape = 'u8[8192]{0}', space=vmem, size = 0x2000, scoped, tag = 'output window, operand 0, single buffered']
    %10 = vsyncpa [#allocation3], 0
    %11 = vsyncpa [#allocation6], 0
    %12 = vsyncpa [#allocation4], 0
    // Predicated region
    $region2: #{tpu_custom_call.1} parent=1 // pred_check
      _
    $region3: #{tpu_custom_call.1} parent=1 // pred_check_branch
      %14 = sbr.rel (0) target = $region5
    $region4: #{tpu_custom_call.1} parent=1 // pred_region
      %s16 = ssub.s32 128, 128
      %17 = vsyncadd [#allocation3], %s16
      %s18 = sshll.u32 [#allocation2], 4
      %s19 = int_to_ptr.vmem [resolvable:$true] %s18
      %24 = dma.hbm_to_vmem [thread:$0]  %s0, 128, %s19, [#allocation3], 64, 64, 4
    $region5: #{tpu_custom_call.1} parent=1 // pred_fallthru
      _
    // Predicated region
    $region6: #{tpu_custom_call.1} parent=1 // pred_check
      _
    $region7: #{tpu_custom_call.1} parent=1 // pred_check_branch
      %26 = sbr.rel (0) target = $region9
    $region8: #{tpu_custom_call.1} parent=1 // pred_region
      _
    $region9: #{tpu_custom_call.1} parent=1 // pred_fallthru
      _
    // Predicated region
    $region10: #{tpu_custom_call.1} parent=1 // pred_check
      _
    $region11: #{tpu_custom_call.1} parent=1 // pred_check_branch
      %28 = sbr.rel (0) target = $region13
    $region12: #{tpu_custom_call.1} parent=1 // pred_region
      %s30 = ssub.s32 3072, 3072
      %31 = vsyncadd [#allocation6], %s30
      %s32 = sshll.u32 [#allocation5], 4
      %s33 = int_to_ptr.vmem [resolvable:$true] %s32
      %38 = dma.hbm_to_vmem [thread:$0]  %s2, 3072, %s33, [#allocation6], 192, 192, 12
    $region13: #{tpu_custom_call.1} parent=1 // pred_fallthru
      _
    // Predicated region
    $region14: #{tpu_custom_call.1} parent=1 // pred_check
      _
    $region15: #{tpu_custom_call.1} parent=1 // pred_check_branch
      %40 = sbr.rel (0) target = $region17
    $region16: #{tpu_custom_call.1} parent=1 // pred_region
      %s42 = ssub.s32 1024, 1024
      %43 = vsyncadd [#allocation6], %s42
      %s44 = sshll.u32 [#allocation7], 4
      %s45 = int_to_ptr.vmem [resolvable:$true] %s44
      %50 = dma.hbm_to_vmem [thread:$0]  %s3, 1024, %s45, [#allocation6], 64, 64, 4
    $region17: #{tpu_custom_call.1} parent=1 // pred_fallthru
      _
    // Predicated region
    $region18: #{tpu_custom_call.1} parent=1 // pred_check
      _
    $region19: #{tpu_custom_call.1} parent=1 // pred_check_branch
      %52 = sbr.rel (0) target = $region21
    $region20: #{tpu_custom_call.1} parent=1 // pred_region
      _
    $region21: #{tpu_custom_call.1} parent=1 // pred_fallthru
      _
    // Predicated region
    $region22: #{tpu_custom_call.1} parent=1 // pred_check
      _
    $region23: #{tpu_custom_call.1} parent=1 // pred_check_branch
      %54 = sbr.rel (0) target = $region25
    $region24: #{tpu_custom_call.1} parent=1 // pred_region
      %55 = dma.done [#allocation3], 128
    $region25: #{tpu_custom_call.1} parent=1 // pred_fallthru
      _
    // Predicated region
    $region26: #{tpu_custom_call.1} parent=1 // pred_check
      _
    $region27: #{tpu_custom_call.1} parent=1 // pred_check_branch
      %57 = sbr.rel (0) target = $region29
    $region28: #{tpu_custom_call.1} parent=1 // pred_region
      %58 = dma.done [#allocation6], 3072
    $region29: #{tpu_custom_call.1} parent=1 // pred_fallthru
      _
    // Predicated region
    $region30: #{tpu_custom_call.1} parent=1 // pred_check
      _
    $region31: #{tpu_custom_call.1} parent=1 // pred_check_branch
      %60 = sbr.rel (0) target = $region33
    $region32: #{tpu_custom_call.1} parent=1 // pred_region
      %61 = dma.done [#allocation6], 1024
    $region33: #{tpu_custom_call.1} parent=1 // pred_fallthru
      _
    %v63 = vld [vmem:[#allocation2] sm:$0xf]
    %v64 = vld [vmem:[#allocation2 + $0x4] sm:$0xf]
    %v65 = vld [vmem:[%s1] sm:$0x1]
    %v66 = vld [vmem:[%s1 + $0x1] sm:$0x1]
    %v67 = vld [vmem:[#allocation5] sm:$0xff]
    %v68 = vld [vmem:[#allocation5 + $0x8] sm:$0xf]
    %v69 = vld [vmem:[#allocation5 + $0xc] sm:$0xff]
    %v70 = vld [vmem:[#allocation5 + $0x14] sm:$0xf]
    %v71 = vld [vmem:[#allocation5 + $0x18] sm:$0xff]
    %v72 = vld [vmem:[#allocation5 + $0x20] sm:$0xf]
    %v73 = vld [vmem:[#allocation5 + $0x24] sm:$0xff]
    %v74 = vld [vmem:[#allocation5 + $0x2c] sm:$0xf]
    %v75 = vld [vmem:[#allocation5 + $0x30] sm:$0xff]
    %v76 = vld [vmem:[#allocation5 + $0x38] sm:$0xf]
    %v77 = vld [vmem:[#allocation5 + $0x3c] sm:$0xff]
    %v78 = vld [vmem:[#allocation5 + $0x44] sm:$0xf]
    %v79 = vld [vmem:[#allocation5 + $0x48] sm:$0xff]
    %v80 = vld [vmem:[#allocation5 + $0x50] sm:$0xf]
    %v81 = vld [vmem:[#allocation5 + $0x54] sm:$0xff]
    %v82 = vld [vmem:[#allocation5 + $0x5c] sm:$0xf]
    %v83 = vld [vmem:[#allocation5 + $0x60] sm:$0xff]
    %v84 = vld [vmem:[#allocation5 + $0x68] sm:$0xf]
    %v85 = vld [vmem:[#allocation5 + $0x6c] sm:$0xff]
    %v86 = vld [vmem:[#allocation5 + $0x74] sm:$0xf]
    %v87 = vld [vmem:[#allocation5 + $0x78] sm:$0xff]
    %v88 = vld [vmem:[#allocation5 + $0x80] sm:$0xf]
    %v89 = vld [vmem:[#allocation5 + $0x84] sm:$0xff]
    %v90 = vld [vmem:[#allocation5 + $0x8c] sm:$0xf]
    %v91 = vld [vmem:[#allocation5 + $0x90] sm:$0xff]
    %v92 = vld [vmem:[#allocation5 + $0x98] sm:$0xf]
    %v93 = vld [vmem:[#allocation5 + $0x9c] sm:$0xff]
    %v94 = vld [vmem:[#allocation5 + $0xa4] sm:$0xf]
    %v95 = vld [vmem:[#allocation5 + $0xa8] sm:$0xff]
    %v96 = vld [vmem:[#allocation5 + $0xb0] sm:$0xf]
    %v97 = vld [vmem:[#allocation5 + $0xb4] sm:$0xff]
    %v98 = vld [vmem:[#allocation5 + $0xbc] sm:$0xf]
    %v99 = vld [vmem:[#allocation7] sm:$0xf]
    %v100 = vld [vmem:[#allocation7 + $0x4] sm:$0xf]
    %v101 = vld [vmem:[#allocation7 + $0x8] sm:$0xf]
    %v102 = vld [vmem:[#allocation7 + $0xc] sm:$0xf]
    %v103 = vld [vmem:[#allocation7 + $0x10] sm:$0xf]
    %v104 = vld [vmem:[#allocation7 + $0x14] sm:$0xf]
    %v105 = vld [vmem:[#allocation7 + $0x18] sm:$0xf]
    %v106 = vld [vmem:[#allocation7 + $0x1c] sm:$0xf]
    %v107 = vld [vmem:[#allocation7 + $0x20] sm:$0xf]
    %v108 = vld [vmem:[#allocation7 + $0x24] sm:$0xf]
    %v109 = vld [vmem:[#allocation7 + $0x28] sm:$0xf]
    %v110 = vld [vmem:[#allocation7 + $0x2c] sm:$0xf]
    %v111 = vld [vmem:[#allocation7 + $0x30] sm:$0xf]
    %v112 = vld [vmem:[#allocation7 + $0x34] sm:$0xf]
    %v113 = vld [vmem:[#allocation7 + $0x38] sm:$0xf]
    %v114 = vld [vmem:[#allocation7 + $0x3c] sm:$0xf]
    %v115 = vld [vmem:[%s4] sm:$0xf]
    %v116 = vld [vmem:[%s4 + $0x4] sm:$0xf]
    %v119 = vunpack.c.l.b16 %v63
    %v120 = vunpack.c.l.b16 %v64
    %v121 = vpack.c.b16 %v120, %v119
    %v155 = vunpack.c.l.b16 %v67
    %v156 = vunpack.c.h.b16 %v67
    %v157 = vunpack.c.l.b16 %v68
    %v158 = vunpack.c.l.b16 %v69
    %v159 = vunpack.c.h.b16 %v69
    %v160 = vunpack.c.l.b16 %v70
    %v161 = vunpack.c.l.b16 %v71
    %v162 = vunpack.c.h.b16 %v71
    %v163 = vunpack.c.l.b16 %v72
    %v164 = vunpack.c.l.b16 %v73
    %v165 = vunpack.c.h.b16 %v73
    %v166 = vunpack.c.l.b16 %v74
    %v167 = vunpack.c.l.b16 %v75
    %v168 = vunpack.c.h.b16 %v75
    %v169 = vunpack.c.l.b16 %v76
    %v170 = vunpack.c.l.b16 %v77
    %v171 = vunpack.c.h.b16 %v77
    %v172 = vunpack.c.l.b16 %v78
    %v173 = vunpack.c.l.b16 %v79
    %v174 = vunpack.c.h.b16 %v79
    %v175 = vunpack.c.l.b16 %v80
    %v176 = vunpack.c.l.b16 %v81
    %v177 = vunpack.c.h.b16 %v81
    %v178 = vunpack.c.l.b16 %v82
    %v179 = vunpack.c.l.b16 %v83
    %v180 = vunpack.c.h.b16 %v83
    %v181 = vunpack.c.l.b16 %v84
    %v182 = vunpack.c.l.b16 %v85
    %v183 = vunpack.c.h.b16 %v85
    %v184 = vunpack.c.l.b16 %v86
    %v185 = vunpack.c.l.b16 %v87
    %v186 = vunpack.c.h.b16 %v87
    %v187 = vunpack.c.l.b16 %v88
    %v188 = vunpack.c.l.b16 %v89
    %v189 = vunpack.c.h.b16 %v89
    %v190 = vunpack.c.l.b16 %v90
    %v191 = vunpack.c.l.b16 %v91
    %v192 = vunpack.c.h.b16 %v91
    %v193 = vunpack.c.l.b16 %v92
    %v194 = vunpack.c.l.b16 %v93
    %v195 = vunpack.c.h.b16 %v93
    %v196 = vunpack.c.l.b16 %v94
    %v197 = vunpack.c.l.b16 %v95
    %v198 = vunpack.c.h.b16 %v95
    %v199 = vunpack.c.l.b16 %v96
    %v200 = vunpack.c.l.b16 %v97
    %v201 = vunpack.c.h.b16 %v97
    %v202 = vunpack.c.l.b16 %v98
    %v203 = vpack.c.b16 %v158, %v155
    %v204 = vpack.c.b16 %v159, %v156
    %v205 = vpack.c.b16 %v160, %v157
    %v206 = vpack.c.b16 %v164, %v161
    %v207 = vpack.c.b16 %v165, %v162
    %v208 = vpack.c.b16 %v166, %v163
    %v209 = vpack.c.b16 %v170, %v167
    %v210 = vpack.c.b16 %v171, %v168
    %v211 = vpack.c.b16 %v172, %v169
    %v212 = vpack.c.b16 %v176, %v173
    %v213 = vpack.c.b16 %v177, %v174
    %v214 = vpack.c.b16 %v178, %v175
    %v215 = vpack.c.b16 %v182, %v179
    %v216 = vpack.c.b16 %v183, %v180
    %v217 = vpack.c.b16 %v184, %v181
    %v218 = vpack.c.b16 %v188, %v185
    %v219 = vpack.c.b16 %v189, %v186
    %v220 = vpack.c.b16 %v190, %v187
    %v221 = vpack.c.b16 %v194, %v191
    %v222 = vpack.c.b16 %v195, %v192
    %v223 = vpack.c.b16 %v196, %v193
    %v224 = vpack.c.b16 %v200, %v197
    %v225 = vpack.c.b16 %v201, %v198
    %v226 = vpack.c.b16 %v202, %v199
    %251 = vmatprep.subr.bf16.mxu0 %v204
    %252 = vmatpush1.bf16.msra.mxu0 %v203
    %253 = vmatprep.subr.bf16.mxu0 %v207
    %254 = vmatpush1.bf16.msra.mxu0 %v206
    %255 = vmatprep.subr.bf16.mxu0 %v210
    %256 = vmatpush1.bf16.msra.mxu0 %v209
    %257 = vmatprep.subr.bf16.mxu0 %v213
    %258 = vmatpush1.bf16.msra.mxu0 %v212
    %259 = vmatprep.subr.bf16.mxu0 %v216
    %260 = vmatpush1.bf16.msra.mxu0 %v215
    %261 = vmatprep.subr.bf16.mxu0 %v219
    %262 = vmatpush1.bf16.msra.mxu0 %v218
    %263 = vmatprep.subr.bf16.mxu0 %v222
    %264 = vmatpush1.bf16.msra.mxu0 %v221
    %265 = vmatprep.subr.bf16.mxu0 %v225
    %266 = vmatpush1.bf16.msra.mxu0 %v224
    %267 = vmatprep.subr.bf16.mxu0 0
    %268 = vmatpush1.bf16.msra.mxu0 0
    %269 = vmatprep.subr.bf16.mxu0 0
    %270 = vmatpush1.bf16.msra.mxu0 0
    %271 = vmatprep.subr.bf16.mxu0 0
    %272 = vmatpush1.bf16.msra.mxu0 0
    %273 = vmatprep.subr.bf16.mxu0 0
    %274 = vmatpush1.bf16.msra.mxu0 0
    %275 = vmatprep.subr.bf16.mxu0 0
    %276 = vmatpush1.bf16.msra.mxu0 0
    %277 = vmatprep.subr.bf16.mxu0 0
    %278 = vmatpush1.bf16.msra.mxu0 0
    %279 = vmatprep.subr.bf16.mxu0 0
    %280 = vmatpush1.bf16.msra.mxu0 0
    %281 = vmatprep.subr.bf16.mxu0 0
    %282 = vmatpush1.bf16.msra.mxu0 0
    %283 = vmatprep.mubr.bf16.mxu0 0
    %284 = vmatmul.mubr.bf16.gmra.mrb[0].mxu0 %v121
    %v285 = vpop.f32.mrb[0].mxu0
    %v286 = vadd.f32 0.0, %v285
    %v287 = vpop.f32.mrb[0].mxu0
    %v288 = vadd.f32 0.0, %v287
    %v289 = vpop.f32.mrb[0].mxu0
    %v290 = vadd.f32 0.0, %v289
    %v291 = vpop.f32.mrb[0].mxu0
    %v292 = vadd.f32 0.0, %v291
    %293 = vdwg.mxu0
    %294 = vmatprep.subr.bf16.mxu0 0
    %295 = vmatpush1.bf16.msra.mxu0 %v205
    %296 = vmatprep.subr.bf16.mxu0 0
    %297 = vmatpush1.bf16.msra.mxu0 %v208
    %298 = vmatprep.subr.bf16.mxu0 0
    %299 = vmatpush1.bf16.msra.mxu0 %v211
    %300 = vmatprep.subr.bf16.mxu0 0
    %301 = vmatpush1.bf16.msra.mxu0 %v214
    %302 = vmatprep.subr.bf16.mxu0 0
    %303 = vmatpush1.bf16.msra.mxu0 %v217
    %304 = vmatprep.subr.bf16.mxu0 0
    %305 = vmatpush1.bf16.msra.mxu0 %v220
    %306 = vmatprep.subr.bf16.mxu0 0
    %307 = vmatpush1.bf16.msra.mxu0 %v223
    %308 = vmatprep.subr.bf16.mxu0 0
    %309 = vmatpush1.bf16.msra.mxu0 %v226
    %310 = vmatprep.subr.bf16.mxu0 0
    %311 = vmatpush1.bf16.msra.mxu0 0
    %312 = vmatprep.subr.bf16.mxu0 0
    %313 = vmatpush1.bf16.msra.mxu0 0
    %314 = vmatprep.subr.bf16.mxu0 0
    %315 = vmatpush1.bf16.msra.mxu0 0
    %316 = vmatprep.subr.bf16.mxu0 0
    %317 = vmatpush1.bf16.msra.mxu0 0
    %318 = vmatprep.subr.bf16.mxu0 0
    %319 = vmatpush1.bf16.msra.mxu0 0
    %320 = vmatprep.subr.bf16.mxu0 0
    %321 = vmatpush1.bf16.msra.mxu0 0
    %322 = vmatprep.subr.bf16.mxu0 0
    %323 = vmatpush1.bf16.msra.mxu0 0
    %324 = vmatprep.subr.bf16.mxu0 0
    %325 = vmatpush1.bf16.msra.mxu0 0
    %326 = vmatprep.mubr.bf16.mxu0 0
    %327 = vmatmul.mubr.bf16.gmra.mrb[0].mxu0 %v121
    %v328 = vpop.f32.mrb[0].mxu0
    %v329 = vadd.f32 0.0, %v328
    %v330 = vpop.f32.mrb[0].mxu0
    %v331 = vpop.f32.mrb[0].mxu0
    %v332 = vadd.f32 0.0, %v331
    %v333 = vpop.f32.mrb[0].mxu0
    %334 = vdwg.mxu0
    %v335 = vpack.c.bf16 %v286, %v286
    %v336 = vpack.c.bf16 %v290, %v290
    %v337 = vpack.c.bf16 %v288, %v288
    %v338 = vpack.c.bf16 %v292, %v292
    %v339 = vpack.c.bf16 %v329, %v329
    %v340 = vpack.c.bf16 %v332, %v332
    %v343 = vlaneseq
    %v344 = vshrl.u32 %v343, 7
    %v345 = vsub.s32 0, %v344
    %v346 = vrot.slane %v65, %v345
    %v347 = vlaneseq
    %v348 = vshrl.u32 %v347, 7
    %v349 = vsub.s32 0, %v348
    %v350 = vrot.slane %v66, %v349
    %353 = vmatprep.subr.bf16.mxu0 0
    %354 = vmatpush1.bf16.xpose.msra.mxu0 %v337
    %355 = vmatprep.subr.bf16.mxu0 0
    %356 = vmatpush1.bf16.xpose.msra.mxu0 0
    %357 = vmatprep.subr.bf16.mxu0 0
    %358 = vmatpush1.bf16.xpose.msra.mxu0 0
    %359 = vmatprep.subr.bf16.mxu0 0
    %360 = vmatpush1.bf16.xpose.msra.mxu0 0
    %361 = vmatprep.subr.bf16.mxu0 0
    %362 = vmatpush1.bf16.xpose.msra.mxu0 0
    %363 = vmatprep.subr.bf16.mxu0 0
    %364 = vmatpush1.bf16.xpose.msra.mxu0 0
    %365 = vmatprep.subr.bf16.mxu0 0
    %366 = vmatpush1.bf16.xpose.msra.mxu0 0
    %367 = vmatprep.subr.bf16.mxu0 0
    %368 = vmatpush1.bf16.xpose.msra.mxu0 0
    %369 = vmatprep.subr.bf16.mxu0 0
    %370 = vmatpush1.bf16.xpose.msra.mxu0 0
    %371 = vmatprep.subr.bf16.mxu0 0
    %372 = vmatpush1.bf16.xpose.msra.mxu0 0
    %373 = vmatprep.subr.bf16.mxu0 0
    %374 = vmatpush1.bf16.xpose.msra.mxu0 0
    %375 = vmatprep.subr.bf16.mxu0 0
    %376 = vmatpush1.bf16.xpose.msra.mxu0 0
    %377 = vmatprep.subr.bf16.mxu0 0
    %378 = vmatpush1.bf16.xpose.msra.mxu0 0
    %379 = vmatprep.subr.bf16.mxu0 0
    %380 = vmatpush1.bf16.xpose.msra.mxu0 0
    %381 = vmatprep.subr.bf16.mxu0 0
    %382 = vmatpush1.bf16.xpose.msra.mxu0 0
    %383 = vmatprep.subr.bf16.mxu0 0
    %384 = vmatpush1.bf16.xpose.msra.mxu0 0
    %385 = vmatprep.mubr.bf16.mxu0 0
    %386 = vmatmul.mubr.bf16.gmra.mrb[0].mxu0 %v335
    %v387 = vpop.f32.mrb[0].mxu0
    %v388 = vadd.f32 %v346, %v387
    %v389 = vpop.f32.mrb[0].mxu0
    %v390 = vpop.f32.mrb[0].mxu0
    %v391 = vpop.f32.mrb[0].mxu0
    %392 = vdwg.mxu0
    %393 = vmatprep.subr.bf16.mxu0 0
    %394 = vmatpush1.bf16.xpose.msra.mxu0 %v338
    %395 = vmatprep.subr.bf16.mxu0 0
    %396 = vmatpush1.bf16.xpose.msra.mxu0 0
    %397 = vmatprep.subr.bf16.mxu0 0
    %398 = vmatpush1.bf16.xpose.msra.mxu0 0
    %399 = vmatprep.subr.bf16.mxu0 0
    %400 = vmatpush1.bf16.xpose.msra.mxu0 0
    %401 = vmatprep.subr.bf16.mxu0 0
    %402 = vmatpush1.bf16.xpose.msra.mxu0 0
    %403 = vmatprep.subr.bf16.mxu0 0
    %404 = vmatpush1.bf16.xpose.msra.mxu0 0
    %405 = vmatprep.subr.bf16.mxu0 0
    %406 = vmatpush1.bf16.xpose.msra.mxu0 0
    %407 = vmatprep.subr.bf16.mxu0 0
    %408 = vmatpush1.bf16.xpose.msra.mxu0 0
    %409 = vmatprep.subr.bf16.mxu0 0
    %410 = vmatpush1.bf16.xpose.msra.mxu0 0
    %411 = vmatprep.subr.bf16.mxu0 0
    %412 = vmatpush1.bf16.xpose.msra.mxu0 0
    %413 = vmatprep.subr.bf16.mxu0 0
    %414 = vmatpush1.bf16.xpose.msra.mxu0 0
    %415 = vmatprep.subr.bf16.mxu0 0
    %416 = vmatpush1.bf16.xpose.msra.mxu0 0
    %417 = vmatprep.subr.bf16.mxu0 0
    %418 = vmatpush1.bf16.xpose.msra.mxu0 0
    %419 = vmatprep.subr.bf16.mxu0 0
    %420 = vmatpush1.bf16.xpose.msra.mxu0 0
    %421 = vmatprep.subr.bf16.mxu0 0
    %422 = vmatpush1.bf16.xpose.msra.mxu0 0
    %423 = vmatprep.subr.bf16.mxu0 0
    %424 = vmatpush1.bf16.xpose.msra.mxu0 0
    %425 = vmatprep.mubr.bf16.mxu0 0
    %426 = vmatmul.mubr.bf16.gmra.mrb[0].mxu0 %v336
    %v427 = vpop.f32.mrb[0].mxu0
    %v428 = vadd.f32 %v350, %v427
    %v429 = vpop.f32.mrb[0].mxu0
    %v430 = vpop.f32.mrb[0].mxu0
    %v431 = vpop.f32.mrb[0].mxu0
    %432 = vdwg.mxu0
    %vm433 = vcmask 64512
    %v434 = vsel %vm433, %v388, -inf
    %435 = vmax.xlane.f32.xlu0 %v434
    %v436 = vpop.xlane.xlu0 %435
    %v437 = vsel %vm433, %v428, -inf
    %438 = vmax.xlane.f32.xlu0 %v437
    %v439 = vpop.xlane.xlu0 %438
    %v440 = vsub.f32 %v388, %v436
    %v441 = vsub.f32 %v428, %v439
    %v442 = vmul.f32 %v440, 1.442695
    %v443 = vpow.pop %v442
    %v444 = vmul.f32 %v441, 1.442695
    %v445 = vpow.pop %v444
    %v446 = vsel %vm433, %v443, 0.0
    %447 = vadd.xlane.f32.xlu0 %v446
    %v448 = vpop.xlane.xlu0 %447
    %v449 = vsel %vm433, %v445, 0.0
    %450 = vadd.xlane.f32.xlu0 %v449
    %v451 = vpop.xlane.xlu0 %450
    %v452 = vrcp.pop %v448
    %v453 = vrcp.pop %v451
    %v454 = vmul.f32 %v443, %v452
    %v455 = vmul.f32 %v445, %v453
    %v456 = vpack.c.bf16 %v454, %v454
    %v457 = vpack.c.bf16 %v455, %v455
    %v459 = vsel %vm433, %v456, 0
    %vm461 = vcmask 1043456
    %v463 = vsel %vm461, %v339, 0
    %465 = vmatprep.subr.bf16.mxu0 0
    %466 = vmatpush1.bf16.msra.mxu0 %v463
    %467 = vmatprep.subr.bf16.mxu0 0
    %468 = vmatpush1.bf16.msra.mxu0 0
    %469 = vmatprep.subr.bf16.mxu0 0
    %470 = vmatpush1.bf16.msra.mxu0 0
    %471 = vmatprep.subr.bf16.mxu0 0
    %472 = vmatpush1.bf16.msra.mxu0 0
    %473 = vmatprep.subr.bf16.mxu0 0
    %474 = vmatpush1.bf16.msra.mxu0 0
    %475 = vmatprep.subr.bf16.mxu0 0
    %476 = vmatpush1.bf16.msra.mxu0 0
    %477 = vmatprep.subr.bf16.mxu0 0
    %478 = vmatpush1.bf16.msra.mxu0 0
    %479 = vmatprep.subr.bf16.mxu0 0
    %480 = vmatpush1.bf16.msra.mxu0 0
    %481 = vmatprep.subr.bf16.mxu0 0
    %482 = vmatpush1.bf16.msra.mxu0 0
    %483 = vmatprep.subr.bf16.mxu0 0
    %484 = vmatpush1.bf16.msra.mxu0 0
    %485 = vmatprep.subr.bf16.mxu0 0
    %486 = vmatpush1.bf16.msra.mxu0 0
    %487 = vmatprep.subr.bf16.mxu0 0
    %488 = vmatpush1.bf16.msra.mxu0 0
    %489 = vmatprep.subr.bf16.mxu0 0
    %490 = vmatpush1.bf16.msra.mxu0 0
    %491 = vmatprep.subr.bf16.mxu0 0
    %492 = vmatpush1.bf16.msra.mxu0 0
    %493 = vmatprep.subr.bf16.mxu0 0
    %494 = vmatpush1.bf16.msra.mxu0 0
    %495 = vmatprep.subr.bf16.mxu0 0
    %496 = vmatpush1.bf16.msra.mxu0 0
    %497 = vmatprep.mubr.bf16.mxu0 0
    %498 = vmatmul.mubr.bf16.gmra.mrb[0].mxu0 %v459
    %v499 = vpop.f32.mrb[0].mxu0
    %v500 = vadd.f32 0.0, %v499
    %v501 = vpop.f32.mrb[0].mxu0
    %v502 = vpop.f32.mrb[0].mxu0
    %v503 = vpop.f32.mrb[0].mxu0
    %504 = vdwg.mxu0
    %v506 = vsel %vm433, %v457, 0
    %v509 = vsel %vm461, %v340, 0
    %511 = vmatprep.subr.bf16.mxu0 0
    %512 = vmatpush1.bf16.msra.mxu0 %v509
    %513 = vmatprep.subr.bf16.mxu0 0
    %514 = vmatpush1.bf16.msra.mxu0 0
    %515 = vmatprep.subr.bf16.mxu0 0
    %516 = vmatpush1.bf16.msra.mxu0 0
    %517 = vmatprep.subr.bf16.mxu0 0
    %518 = vmatpush1.bf16.msra.mxu0 0
    %519 = vmatprep.subr.bf16.mxu0 0
    %520 = vmatpush1.bf16.msra.mxu0 0
    %521 = vmatprep.subr.bf16.mxu0 0
    %522 = vmatpush1.bf16.msra.mxu0 0
    %523 = vmatprep.subr.bf16.mxu0 0
    %524 = vmatpush1.bf16.msra.mxu0 0
    %525 = vmatprep.subr.bf16.mxu0 0
    %526 = vmatpush1.bf16.msra.mxu0 0
    %527 = vmatprep.subr.bf16.mxu0 0
    %528 = vmatpush1.bf16.msra.mxu0 0
    %529 = vmatprep.subr.bf16.mxu0 0
    %530 = vmatpush1.bf16.msra.mxu0 0
    %531 = vmatprep.subr.bf16.mxu0 0
    %532 = vmatpush1.bf16.msra.mxu0 0
    %533 = vmatprep.subr.bf16.mxu0 0
    %534 = vmatpush1.bf16.msra.mxu0 0
    %535 = vmatprep.subr.bf16.mxu0 0
    %536 = vmatpush1.bf16.msra.mxu0 0
    %537 = vmatprep.subr.bf16.mxu0 0
    %538 = vmatpush1.bf16.msra.mxu0 0
    %539 = vmatprep.subr.bf16.mxu0 0
    %540 = vmatpush1.bf16.msra.mxu0 0
    %541 = vmatprep.subr.bf16.mxu0 0
    %542 = vmatpush1.bf16.msra.mxu0 0
    %543 = vmatprep.mubr.bf16.mxu0 0
    %544 = vmatmul.mubr.bf16.gmra.mrb[0].mxu0 %v506
    %v545 = vpop.f32.mrb[0].mxu0
    %v546 = vadd.f32 0.0, %v545
    %v547 = vpop.f32.mrb[0].mxu0
    %v548 = vpop.f32.mrb[0].mxu0
    %v549 = vpop.f32.mrb[0].mxu0
    %550 = vdwg.mxu0
    %v551 = vpack.c.bf16 %v546, %v500
    %v568 = vunpack.c.l.b16 %v99
    %v569 = vunpack.c.l.b16 %v100
    %v570 = vunpack.c.l.b16 %v101
    %v571 = vunpack.c.l.b16 %v102
    %v572 = vunpack.c.l.b16 %v103
    %v573 = vunpack.c.l.b16 %v104
    %v574 = vunpack.c.l.b16 %v105
    %v575 = vunpack.c.l.b16 %v106
    %v576 = vunpack.c.l.b16 %v107
    %v577 = vunpack.c.l.b16 %v108
    %v578 = vunpack.c.l.b16 %v109
    %v579 = vunpack.c.l.b16 %v110
    %v580 = vunpack.c.l.b16 %v111
    %v581 = vunpack.c.l.b16 %v112
    %v582 = vunpack.c.l.b16 %v113
    %v583 = vunpack.c.l.b16 %v114
    %v584 = vpack.c.b16 %v569, %v568
    %v585 = vpack.c.b16 %v571, %v570
    %v586 = vpack.c.b16 %v573, %v572
    %v587 = vpack.c.b16 %v575, %v574
    %v588 = vpack.c.b16 %v577, %v576
    %v589 = vpack.c.b16 %v579, %v578
    %v590 = vpack.c.b16 %v581, %v580
    %v591 = vpack.c.b16 %v583, %v582
    %600 = vmatprep.subr.bf16.mxu0 0
    %601 = vmatpush1.bf16.msra.mxu0 %v584
    %602 = vmatprep.subr.bf16.mxu0 0
    %603 = vmatpush1.bf16.msra.mxu0 %v585
    %604 = vmatprep.subr.bf16.mxu0 0
    %605 = vmatpush1.bf16.msra.mxu0 %v586
    %606 = vmatprep.subr.bf16.mxu0 0
    %607 = vmatpush1.bf16.msra.mxu0 %v587
    %608 = vmatprep.subr.bf16.mxu0 0
    %609 = vmatpush1.bf16.msra.mxu0 %v588
    %610 = vmatprep.subr.bf16.mxu0 0
    %611 = vmatpush1.bf16.msra.mxu0 %v589
    %612 = vmatprep.subr.bf16.mxu0 0
    %613 = vmatpush1.bf16.msra.mxu0 %v590
    %614 = vmatprep.subr.bf16.mxu0 0
    %615 = vmatpush1.bf16.msra.mxu0 %v591
    %616 = vmatprep.subr.bf16.mxu0 0
    %617 = vmatpush1.bf16.msra.mxu0 0
    %618 = vmatprep.subr.bf16.mxu0 0
    %619 = vmatpush1.bf16.msra.mxu0 0
    %620 = vmatprep.subr.bf16.mxu0 0
    %621 = vmatpush1.bf16.msra.mxu0 0
    %622 = vmatprep.subr.bf16.mxu0 0
    %623 = vmatpush1.bf16.msra.mxu0 0
    %624 = vmatprep.subr.bf16.mxu0 0
    %625 = vmatpush1.bf16.msra.mxu0 0
    %626 = vmatprep.subr.bf16.mxu0 0
    %627 = vmatpush1.bf16.msra.mxu0 0
    %628 = vmatprep.subr.bf16.mxu0 0
    %629 = vmatpush1.bf16.msra.mxu0 0
    %630 = vmatprep.subr.bf16.mxu0 0
    %631 = vmatpush1.bf16.msra.mxu0 0
    %632 = vmatprep.mubr.bf16.mxu0 0
    %633 = vmatmul.mubr.bf16.gmra.mrb[0].mxu0 %v551
    %v634 = vpop.f32.mrb[0].mxu0
    %v635 = vadd.f32 0.0, %v634
    %v636 = vpop.f32.mrb[0].mxu0
    %v637 = vpop.f32.mrb[0].mxu0
    %v638 = vadd.f32 0.0, %v637
    %v639 = vpop.f32.mrb[0].mxu0
    %640 = vdwg.mxu0
    %v641 = vunpack.c.l.bf16 %v63
    %v642 = vunpack.c.l.bf16 %v64
    %v643 = vadd.f32 %v635, %v641
    %v644 = vadd.f32 %v638, %v642
    %v645 = vpack.c.bf16 %v643, %v643
    %v646 = vpack.c.bf16 %v644, %v644
    %v649 = vunpack.c.l.b16 %v645
    %v650 = vunpack.c.l.b16 %v646
    %v651 = vpack.c.b16 %v650, %v649
    %v655 = vunpack.c.l.b16 %v115
    %v656 = vunpack.c.l.b16 %v116
    %v657 = vpack.c.b16 %v656, %v655
    %659 = vmatprep.subr.bf16.mxu0 0
    %660 = vmatpush1.bf16.xpose.msra.mxu0 %v657
    %661 = vmatprep.subr.bf16.mxu0 0
    %662 = vmatpush1.bf16.xpose.msra.mxu0 0
    %663 = vmatprep.subr.bf16.mxu0 0
    %664 = vmatpush1.bf16.xpose.msra.mxu0 0
    %665 = vmatprep.subr.bf16.mxu0 0
    %666 = vmatpush1.bf16.xpose.msra.mxu0 0
    %667 = vmatprep.subr.bf16.mxu0 0
    %668 = vmatpush1.bf16.xpose.msra.mxu0 0
    %669 = vmatprep.subr.bf16.mxu0 0
    %670 = vmatpush1.bf16.xpose.msra.mxu0 0
    %671 = vmatprep.subr.bf16.mxu0 0
    %672 = vmatpush1.bf16.xpose.msra.mxu0 0
    %673 = vmatprep.subr.bf16.mxu0 0
    %674 = vmatpush1.bf16.xpose.msra.mxu0 0
    %675 = vmatprep.subr.bf16.mxu0 0
    %676 = vmatpush1.bf16.xpose.msra.mxu0 0
    %677 = vmatprep.subr.bf16.mxu0 0
    %678 = vmatpush1.bf16.xpose.msra.mxu0 0
    %679 = vmatprep.subr.bf16.mxu0 0
    %680 = vmatpush1.bf16.xpose.msra.mxu0 0
    %681 = vmatprep.subr.bf16.mxu0 0
    %682 = vmatpush1.bf16.xpose.msra.mxu0 0
    %683 = vmatprep.subr.bf16.mxu0 0
    %684 = vmatpush1.bf16.xpose.msra.mxu0 0
    %685 = vmatprep.subr.bf16.mxu0 0
    %686 = vmatpush1.bf16.xpose.msra.mxu0 0
    %687 = vmatprep.subr.bf16.mxu0 0
    %688 = vmatpush1.bf16.xpose.msra.mxu0 0
    %689 = vmatprep.subr.bf16.mxu0 0
    %690 = vmatpush1.bf16.xpose.msra.mxu0 0
    %691 = vmatprep.mubr.bf16.mxu0 0
    %692 = vmatmul.mubr.bf16.gmra.mrb[0].mxu0 %v651
    %v693 = vpop.f32.mrb[0].mxu0
    %v694 = vadd.f32 0.0, %v693
    %v695 = vpop.f32.mrb[0].mxu0
    %v696 = vpop.f32.mrb[0].mxu0
    %v697 = vadd.f32 0.0, %v696
    %v698 = vpop.f32.mrb[0].mxu0
    %699 = vdwg.mxu0
    %700 = vxpose.xlu0.b32.start [1/16] %v694, 128
    %701 = vxpose.xlu0.b32.cont [2/16] 0.0, 128
    %702 = vxpose.xlu0.b32.cont [3/16] 0.0, 128
    %703 = vxpose.xlu0.b32.cont [4/16] 0.0, 128
    %704 = vxpose.xlu0.b32.cont [5/16] 0.0, 128
    %705 = vxpose.xlu0.b32.cont [6/16] 0.0, 128
    %706 = vxpose.xlu0.b32.cont [7/16] 0.0, 128
    %707 = vxpose.xlu0.b32.cont [8/16] 0.0, 128
    %708 = vxpose.xlu0.b32.cont [9/16] 0.0, 128
    %709 = vxpose.xlu0.b32.cont [10/16] 0.0, 128
    %710 = vxpose.xlu0.b32.cont [11/16] 0.0, 128
    %711 = vxpose.xlu0.b32.cont [12/16] 0.0, 128
    %712 = vxpose.xlu0.b32.cont [13/16] 0.0, 128
    %713 = vxpose.xlu0.b32.cont [14/16] 0.0, 128
    %714 = vxpose.xlu0.b32.cont [15/16] 0.0, 128
    %715 = vxpose.xlu0.b32.end [16/16] 0.0, 128
    %v716 = vpop.trf.xlu0
    %v717 = vpop.trf.xlu0
    %v718 = vpop.trf.xlu0
    %v719 = vpop.trf.xlu0
    %v720 = vpop.trf.xlu0
    %v721 = vpop.trf.xlu0
    %v722 = vpop.trf.xlu0
    %v723 = vpop.trf.xlu0
    %v724 = vpop.trf.xlu0
    %v725 = vpop.trf.xlu0
    %v726 = vpop.trf.xlu0
    %v727 = vpop.trf.xlu0
    %v728 = vpop.trf.xlu0
    %v729 = vpop.trf.xlu0
    %v730 = vpop.trf.xlu0
    %v731 = vpop.trf.xlu0
    %732 = vxpose.xlu0.b32.start [1/16] %v697, 128
    %733 = vxpose.xlu0.b32.cont [2/16] 0.0, 128
    %734 = vxpose.xlu0.b32.cont [3/16] 0.0, 128
    %735 = vxpose.xlu0.b32.cont [4/16] 0.0, 128
    %736 = vxpose.xlu0.b32.cont [5/16] 0.0, 128
    %737 = vxpose.xlu0.b32.cont [6/16] 0.0, 128
    %738 = vxpose.xlu0.b32.cont [7/16] 0.0, 128
    %739 = vxpose.xlu0.b32.cont [8/16] 0.0, 128
    %740 = vxpose.xlu0.b32.cont [9/16] 0.0, 128
    %741 = vxpose.xlu0.b32.cont [10/16] 0.0, 128
    %742 = vxpose.xlu0.b32.cont [11/16] 0.0, 128
    %743 = vxpose.xlu0.b32.cont [12/16] 0.0, 128
    %744 = vxpose.xlu0.b32.cont [13/16] 0.0, 128
    %745 = vxpose.xlu0.b32.cont [14/16] 0.0, 128
    %746 = vxpose.xlu0.b32.cont [15/16] 0.0, 128
    %747 = vxpose.xlu0.b32.end [16/16] 0.0, 128
    %v748 = vpop.trf.xlu0
    %v749 = vpop.trf.xlu0
    %v750 = vpop.trf.xlu0
    %v751 = vpop.trf.xlu0
    %v752 = vpop.trf.xlu0
    %v753 = vpop.trf.xlu0
    %v754 = vpop.trf.xlu0
    %v755 = vpop.trf.xlu0
    %v756 = vpop.trf.xlu0
    %v757 = vpop.trf.xlu0
    %v758 = vpop.trf.xlu0
    %v759 = vpop.trf.xlu0
    %v760 = vpop.trf.xlu0
    %v761 = vpop.trf.xlu0
    %v762 = vpop.trf.xlu0
    %v763 = vpop.trf.xlu0
    %v764 = vsel %vm433, %v716, -inf
    %765 = vmax.xlane.f32.xlu0 %v764
    %v766 = vpop.xlane.xlu0 %765
    %v767 = vsel %vm433, %v717, -inf
    %768 = vmax.xlane.f32.xlu0 %v767
    %v769 = vpop.xlane.xlu0 %768
    %v770 = vsel %vm433, %v748, -inf
    %771 = vmax.xlane.f32.xlu0 %v770
    %v772 = vpop.xlane.xlu0 %771
    %v773 = vsel %vm433, %v749, -inf
    %774 = vmax.xlane.f32.xlu0 %v773
    %v775 = vpop.xlane.xlu0 %774
    %v776 = vsub.f32 %v716, %v766
    %v777 = vsub.f32 %v717, %v769
    %v778 = vsub.f32 %v748, %v772
    %v779 = vsub.f32 %v749, %v775
    %v780 = vmul.f32 %v776, 1.442695
    %v781 = vpow.pop %v780
    %v782 = vmul.f32 %v777, 1.442695
    %v783 = vpow.pop %v782
    %v784 = vmul.f32 %v778, 1.442695
    %v785 = vpow.pop %v784
    %v786 = vmul.f32 %v779, 1.442695
    %v787 = vpow.pop %v786
    %v788 = vsel %vm433, %v781, 0.0
    %789 = vadd.xlane.f32.xlu0 %v788
    %v790 = vpop.xlane.xlu0 %789
    %v791 = vsel %vm433, %v783, 0.0
    %792 = vadd.xlane.f32.xlu0 %v791
    %v793 = vpop.xlane.xlu0 %792
    %v794 = vsel %vm433, %v785, 0.0
    %795 = vadd.xlane.f32.xlu0 %v794
    %v796 = vpop.xlane.xlu0 %795
    %v797 = vsel %vm433, %v787, 0.0
    %798 = vadd.xlane.f32.xlu0 %v797
    %v799 = vpop.xlane.xlu0 %798
    %v800 = vrcp.pop %v790
    %v801 = vrcp.pop %v793
    %v802 = vrcp.pop %v796
    %v803 = vrcp.pop %v799
    %v804 = vmul.f32 %v781, %v800
    %v805 = vmul.f32 %v783, %v801
    %v806 = vmul.f32 %v785, %v802
    %v807 = vmul.f32 %v787, %v803
    %v808 = vpack.c.bf16 %v805, %v804
    %v809 = vpack.c.bf16 %v807, %v806
    %v811 = vsel %vm433, %v808, 0
    %v814 = vsel %vm461, %v645, 0
    %816 = vmatprep.subr.bf16.mxu0 0
    %817 = vmatpush1.bf16.msra.mxu0 %v814
    %818 = vmatprep.subr.bf16.mxu0 0
    %819 = vmatpush1.bf16.msra.mxu0 0
    %820 = vmatprep.subr.bf16.mxu0 0
    %821 = vmatpush1.bf16.msra.mxu0 0
    %822 = vmatprep.subr.bf16.mxu0 0
    %823 = vmatpush1.bf16.msra.mxu0 0
    %824 = vmatprep.subr.bf16.mxu0 0
    %825 = vmatpush1.bf16.msra.mxu0 0
    %826 = vmatprep.subr.bf16.mxu0 0
    %827 = vmatpush1.bf16.msra.mxu0 0
    %828 = vmatprep.subr.bf16.mxu0 0
    %829 = vmatpush1.bf16.msra.mxu0 0
    %830 = vmatprep.subr.bf16.mxu0 0
    %831 = vmatpush1.bf16.msra.mxu0 0
    %832 = vmatprep.subr.bf16.mxu0 0
    %833 = vmatpush1.bf16.msra.mxu0 0
    %834 = vmatprep.subr.bf16.mxu0 0
    %835 = vmatpush1.bf16.msra.mxu0 0
    %836 = vmatprep.subr.bf16.mxu0 0
    %837 = vmatpush1.bf16.msra.mxu0 0
    %838 = vmatprep.subr.bf16.mxu0 0
    %839 = vmatpush1.bf16.msra.mxu0 0
    %840 = vmatprep.subr.bf16.mxu0 0
    %841 = vmatpush1.bf16.msra.mxu0 0
    %842 = vmatprep.subr.bf16.mxu0 0
    %843 = vmatpush1.bf16.msra.mxu0 0
    %844 = vmatprep.subr.bf16.mxu0 0
    %845 = vmatpush1.bf16.msra.mxu0 0
    %846 = vmatprep.subr.bf16.mxu0 0
    %847 = vmatpush1.bf16.msra.mxu0 0
    %848 = vmatprep.mubr.bf16.mxu0 0
    %849 = vmatmul.mubr.bf16.gmra.mrb[0].mxu0 %v811
    %v850 = vpop.f32.mrb[0].mxu0
    %v851 = vadd.f32 0.0, %v850
    %v852 = vpop.f32.mrb[0].mxu0
    %v853 = vpop.f32.mrb[0].mxu0
    %v854 = vadd.f32 0.0, %v853
    %v855 = vpop.f32.mrb[0].mxu0
    %856 = vdwg.mxu0
    %v858 = vsel %vm433, %v809, 0
    %v861 = vsel %vm461, %v646, 0
    %863 = vmatprep.subr.bf16.mxu0 0
    %864 = vmatpush1.bf16.msra.mxu0 %v861
    %865 = vmatprep.subr.bf16.mxu0 0
    %866 = vmatpush1.bf16.msra.mxu0 0
    %867 = vmatprep.subr.bf16.mxu0 0
    %868 = vmatpush1.bf16.msra.mxu0 0
    %869 = vmatprep.subr.bf16.mxu0 0
    %870 = vmatpush1.bf16.msra.mxu0 0
    %871 = vmatprep.subr.bf16.mxu0 0
    %872 = vmatpush1.bf16.msra.mxu0 0
    %873 = vmatprep.subr.bf16.mxu0 0
    %874 = vmatpush1.bf16.msra.mxu0 0
    %875 = vmatprep.subr.bf16.mxu0 0
    %876 = vmatpush1.bf16.msra.mxu0 0
    %877 = vmatprep.subr.bf16.mxu0 0
    %878 = vmatpush1.bf16.msra.mxu0 0
    %879 = vmatprep.subr.bf16.mxu0 0
    %880 = vmatpush1.bf16.msra.mxu0 0
    %881 = vmatprep.subr.bf16.mxu0 0
    %882 = vmatpush1.bf16.msra.mxu0 0
    %883 = vmatprep.subr.bf16.mxu0 0
    %884 = vmatpush1.bf16.msra.mxu0 0
    %885 = vmatprep.subr.bf16.mxu0 0
    %886 = vmatpush1.bf16.msra.mxu0 0
    %887 = vmatprep.subr.bf16.mxu0 0
    %888 = vmatpush1.bf16.msra.mxu0 0
    %889 = vmatprep.subr.bf16.mxu0 0
    %890 = vmatpush1.bf16.msra.mxu0 0
    %891 = vmatprep.subr.bf16.mxu0 0
    %892 = vmatpush1.bf16.msra.mxu0 0
    %893 = vmatprep.subr.bf16.mxu0 0
    %894 = vmatpush1.bf16.msra.mxu0 0
    %895 = vmatprep.mubr.bf16.mxu0 0
    %896 = vmatmul.mubr.bf16.gmra.mrb[0].mxu0 %v858
    %v897 = vpop.f32.mrb[0].mxu0
    %v898 = vadd.f32 0.0, %v897
    %v899 = vpop.f32.mrb[0].mxu0
    %v900 = vpop.f32.mrb[0].mxu0
    %v901 = vadd.f32 0.0, %v900
    %v902 = vpop.f32.mrb[0].mxu0
    %903 = vdwg.mxu0
    %v904 = vpack.c.bf16 %v854, %v851
    %v905 = vpack.c.bf16 %v901, %v898
    %v908 = vunpack.c.l.b16 %v904
    %v909 = vunpack.c.h.b16 %v904
    %v910 = vunpack.c.l.b16 %v905
    %v911 = vunpack.c.h.b16 %v905
    %v912 = vpack.c.b16 %v908, %v908
    %v913 = vpack.c.b16 %v909, %v909
    %v914 = vpack.c.b16 %v910, %v910
    %v915 = vpack.c.b16 %v911, %v911
    %920 = vst [vmem:[#allocation8] sm:$0xf] %v912
    %921 = vst [vmem:[#allocation8 + $0x4] sm:$0xf] %v913
    %922 = vst [vmem:[#allocation8 + $0x8] sm:$0xf] %v914
    %923 = vst [vmem:[#allocation8 + $0xc] sm:$0xf] %v915
    // Predicated region
    $region34: #{tpu_custom_call.1} parent=1 // pred_check
      _
    $region35: #{tpu_custom_call.1} parent=1 // pred_check_branch
      %925 = sbr.rel (0) target = $region37
    $region36: #{tpu_custom_call.1} parent=1 // pred_region
      %s927 = ssub.s32 256, 256
      %928 = vsyncadd [#allocation4], %s927
      %s929 = sshll.u32 [#allocation8], 4
      %s930 = int_to_ptr.vmem [resolvable:$true] %s929
      %935 = dma.vmem_to_hbm [thread:$0]  %s930, 256, %s5, [#allocation4], 64, 64, 4
    $region37: #{tpu_custom_call.1} parent=1 // pred_fallthru
      _
    // Predicated region
    $region38: #{tpu_custom_call.1} parent=1 // pred_check
      _
    $region39: #{tpu_custom_call.1} parent=1 // pred_check_branch
      %937 = sbr.rel (0) target = $region41
    $region40: #{tpu_custom_call.1} parent=1 // pred_region
      %938 = dma.done [#allocation4], 256
    $region41: #{tpu_custom_call.1} parent=1 // pred_fallthru
      _
    %939 = vsyncpa [#allocation3], 1
    %940 = vsyncpa [#allocation6], 1
    %941 = vsyncpa [#allocation4], 1

</llo_original>
